<compile_context>
chip_gen: v7x
topology: tpu7x:2x2x1
jax: 0.10.0
libtpu: 0.0.40
codegen_flags: <defaults>
</compile_context>

<pallas_src>
import jax
import jax.numpy as jnp
from jax.experimental import pallas as pl
from jax.experimental.pallas import tpu as pltpu


def _make_kernel(L):
    def kernel(x_ref, w1_ref, b1_ref, w2_ref, b2_ref, fcw_ref, fcb_ref, o_ref):
        # x_ref: (b_tile*L, 3*Cin) bf16 -- conv1 taps [x[t-1], x[t], x[t+1]] stacked on host.
        BL = x_ref.shape[0]
        B = BL // L
        H = w1_ref.shape[1]

        # ---- conv1: single MXU matmul over tap-stacked channels, f32 bias+ReLU ----
        h1 = jnp.dot(x_ref[...], w1_ref[...], preferred_element_type=jnp.float32)
        h1 = jnp.maximum(h1 + b1_ref[...], 0.0)                          # (BL, H) f32

        # ---- conv2: shift-by-roll (XLU) + boundary mask, three per-tap matmuls ----
        # Rolling the merged (batch*time) axis is safe: the rows that wrap across
        # batch boundaries are exactly the t==0 / t==L-1 rows that the 'same'
        # padding zeroes anyway.
        t_idx = jax.lax.broadcasted_iota(jnp.int32, (BL, 1), 0) % L
        prev = jnp.where(t_idx == 0, 0.0, pltpu.roll(h1, 1, axis=0))         # x[t-1]
        nxt = jnp.where(t_idx == L - 1, 0.0, pltpu.roll(h1, BL - 1, axis=0))  # == roll(-1): x[t+1]
        h2 = jnp.dot(prev.astype(jnp.bfloat16), w2_ref[0],
                     preferred_element_type=jnp.float32)
        h2 = h2 + jnp.dot(h1.astype(jnp.bfloat16), w2_ref[1],
                          preferred_element_type=jnp.float32)
        h2 = h2 + jnp.dot(nxt.astype(jnp.bfloat16), w2_ref[2],
                          preferred_element_type=jnp.float32)
        h2 = jnp.maximum(h2 + b2_ref[...], 0.0)                          # (BL, H) f32

        # ---- mean over time (f32 sum; 1/L folded into fc weights) + Linear ----
        pooled = jnp.sum(h2.reshape(B, L, H), axis=1)                    # (B, H) f32
        out = jnp.dot(pooled.astype(jnp.bfloat16), fcw_ref[...],
                      preferred_element_type=jnp.float32) + fcb_ref[...]
        o_ref[...] = out.astype(o_ref.dtype)                             # (B, 128) lane-dense store
    return kernel


def _vmem_capacity_bytes():
    try:
        return int(pltpu.get_tpu_info().vmem_capacity_bytes)
    except Exception:
        return 64 * 1024 * 1024                        # v7x-safe fallback


def _bytes_per_bt_row(Cin, H):
    # Conservative lane-padded VMEM bytes per (batch, time) row in one grid step.
    def pad(c):
        return ((c + 127) // 128) * 128
    in_bytes = 2 * pad(3 * Cin) * 2                    # bf16 input block, double-buffered
    f32_live = 4 * pad(H) * 4                          # h1, prev, next, h2
    bf16_live = 3 * pad(H) * 2                         # bf16 matmul operands
    partials = 2 * pad(H) * 4                          # dot partials / compiler temporaries
    return in_bytes + f32_live + bf16_live + partials


def _choose_b_tile(N, L, Cin, H, vmem_cap):
    budget = int(0.45 * vmem_cap)                      # intermediates budget (leaves slack)
    cap = max(8, (budget // (L * _bytes_per_bt_row(Cin, H))) // 8 * 8)
    if N > cap:
        return cap
    if N >= 16:
        # >= 2 grid blocks so the "parallel" batch axis can shard across v7x's 2 TCs.
        return min(cap, max(8, ((N + 1) // 2 + 7) // 8 * 8))
    return N                                           # tiny batch: single block == full dims


def biometric_music_model(x_ncl, w1, b1, w2, b2, fc_w, fc_b):
    """Pallas forward. x_ncl: (N, Cin, L) f32 (PyTorch Conv1d layout). Returns (N, O).

    Weight layout invariants (== torch params permuted):
      w1: (3, Cin, H) = conv1.weight.permute(2, 1, 0); w1[k] multiplies x[t-1+k]
      w2: (3, H,   H) = conv2.weight.permute(2, 1, 0)
      fc_w: (H, O)    = fc.weight.T ;  fc_b: (O,)
    """
    N, Cin, L = x_ncl.shape
    H = w1.shape[2]
    O = fc_w.shape[1]
    O_PAD = 128
    assert w1.shape == (3, Cin, H), "expected conv1.weight.permute(2,1,0)"
    assert w2.shape == (3, H, H), "expected conv2.weight.permute(2,1,0)"

    vmem_cap = _vmem_capacity_bytes()
    b_tile = _choose_b_tile(N, L, Cin, H, vmem_cap)
    num_blocks = pl.cdiv(N, b_tile)
    n_pad = num_blocks * b_tile
    vmem_limit = min(int(0.85 * vmem_cap), 112 * 1024 * 1024)

    # Host-side prep: NCL -> NLC, stack the 3 conv1 taps along channels, flatten
    # (batch, time) into matmul rows, cast to bf16 (halves input HBM traffic).
    x_nlc = jnp.transpose(x_ncl, (0, 2, 1))                                # (N, L, Cin)
    zrow = jnp.zeros((N, 1, Cin), x_nlc.dtype)
    x_cat = jnp.concatenate(
        [jnp.concatenate([zrow, x_nlc[:, :L - 1]], axis=1),                # x[t-1]
         x_nlc,                                                            # x[t]
         jnp.concatenate([x_nlc[:, 1:], zrow], axis=1)], axis=-1)          # x[t+1]  (N, L, 3Cin)
    if n_pad != N:
        x_cat = jnp.pad(x_cat, ((0, n_pad - N), (0, 0), (0, 0)))
    x_rows = x_cat.reshape(n_pad * L, 3 * Cin).astype(jnp.bfloat16)

    # bf16 matmul weights; f32 biases. Fold mean's 1/L into the fc weight and
    # zero-pad the output dim to 128 lanes for a dense store.
    w1s = w1.reshape(3 * Cin, H).astype(jnp.bfloat16)
    w2b = w2.astype(jnp.bfloat16)
    b1_2d = b1.reshape(1, H).astype(jnp.float32)
    b2_2d = b2.reshape(1, H).astype(jnp.float32)
    fcw_pad = jnp.zeros((H, O_PAD), jnp.float32).at[:, :O].set(fc_w / L).astype(jnp.bfloat16)
    fcb_pad = jnp.zeros((1, O_PAD), jnp.float32).at[:, :O].set(fc_b)

    out = pl.pallas_call(
        _make_kernel(L),
        out_shape=jax.ShapeDtypeStruct((n_pad, O_PAD), jnp.float32),
        grid_spec=pltpu.PrefetchScalarGridSpec(
            num_scalar_prefetch=0,
            grid=(num_blocks,),
            in_specs=[
                pl.BlockSpec((b_tile * L, 3 * Cin), lambda n: (n, 0)),
                # Parameters: constant index maps -> resident, not re-fetched per step.
                pl.BlockSpec((3 * Cin, H), lambda n: (0, 0)),
                pl.BlockSpec((1, H), lambda n: (0, 0)),
                pl.BlockSpec((3, H, H), lambda n: (0, 0, 0)),
                pl.BlockSpec((1, H), lambda n: (0, 0)),
                pl.BlockSpec((H, O_PAD), lambda n: (0, 0)),
                pl.BlockSpec((1, O_PAD), lambda n: (0, 0)),
            ],
            out_specs=pl.BlockSpec((b_tile, O_PAD), lambda n: (n, 0)),
        ),
        compiler_params=pltpu.CompilerParams(
            dimension_semantics=("parallel",),
            vmem_limit_bytes=vmem_limit),
    )(x_rows, w1s, b1_2d, w2b, b2_2d, fcw_pad, fcb_pad)

    return out[:N, :O]


def reference_forward(x_ncl, w1, b1, w2, b2, fc_w, fc_b):
    """Pure-JAX f32 reference matching the PyTorch forward (for correctness check)."""
    x = jnp.transpose(x_ncl, (0, 2, 1))               # (N, L, Cin)
    L = x.shape[1]

    def conv(inp, w, b):
        pad = jnp.pad(inp, ((0, 0), (1, 1), (0, 0)))
        acc = jnp.einsum('nlc,ch->nlh', pad[:, 0:L], w[0])
        acc += jnp.einsum('nlc,ch->nlh', pad[:, 1:L + 1], w[1])
        acc += jnp.einsum('nlc,ch->nlh', pad[:, 2:L + 2], w[2])
        return acc + b

    h1 = jnp.maximum(conv(x, w1, b1), 0.0)
    h2 = jnp.maximum(conv(h1, w2, b2), 0.0)
    pooled = jnp.mean(h2, axis=1)                     # (N, H)
    return pooled @ fc_w + fc_b                       # (N, O)


if __name__ == "__main__":
    # Small, module-consistent shapes.
    N = 2            # batch
    Cin = 4          # input_size (biometric features)
    L = 16           # sequence length
    H = 32           # hidden_size
    O = 8            # output_size

    key = jax.random.PRNGKey(0)
    kx, k1, k2, k3, k4, k5, k6 = jax.random.split(key, 7)

    x = jax.random.normal(kx, (N, Cin, L), dtype=jnp.float32)

    # Deterministic synthetic parameters (same shapes as the nn.Module's, with
    # conv weights stored as (k, Cin, Cout) = torch weight permuted (2, 1, 0)
    # and fc_w = torch fc.weight.T).
    w1 = 0.1 * jax.random.normal(k1, (3, Cin, H), dtype=jnp.float32)
    b1 = 0.1 * jax.random.normal(k2, (H,), dtype=jnp.float32)
    w2 = 0.1 * jax.random.normal(k3, (3, H, H), dtype=jnp.float32)
    b2 = 0.1 * jax.random.normal(k4, (H,), dtype=jnp.float32)
    fc_w = 0.1 * jax.random.normal(k5, (H, O), dtype=jnp.float32)
    fc_b = 0.1 * jax.random.normal(k6, (O,), dtype=jnp.float32)

    out = biometric_music_model(x, w1, b1, w2, b2, fc_w, fc_b)
    out = jax.block_until_ready(out)

    ref = reference_forward(x, w1, b1, w2, b2, fc_w, fc_b)
    assert out.shape == (N, O)
    # Tolerance accounts for bf16 matmul operands (f32 accumulation).
    assert jnp.allclose(out, ref, atol=1e-2, rtol=1e-2), "Pallas output mismatch vs reference"

    print("KERNEL_OK")
</pallas_src>

<mosaic_0001>
module attributes {stable_mosaic.version = 11 : i64} {
  func.func @kernel(%arg0: i32, %arg1: memref<32x12xbf16, #tpu.memory_space<vmem>>, %arg2: memref<12x32xbf16, #tpu.memory_space<vmem>>, %arg3: memref<1x32xf32, #tpu.memory_space<vmem>>, %arg4: memref<3x32x32xbf16, #tpu.memory_space<vmem>>, %arg5: memref<1x32xf32, #tpu.memory_space<vmem>>, %arg6: memref<32x128xbf16, #tpu.memory_space<vmem>>, %arg7: memref<1x128xf32, #tpu.memory_space<vmem>>, %arg8: memref<2x128xf32, #tpu.memory_space<vmem>>) attributes {dimension_semantics = [#tpu.dimension_semantics<parallel>], iteration_bounds = array<i64: 1>, scalar_prefetch = 0 : i64, scratch_operands = 0 : i64, tpu.core_type = #tpu.core_type<tc>, window_params = [{transform_indices = @transform_0, window_bounds = array<i64: 32, 12>}, {pipeline_mode = #tpu.pipeline_mode<synchronous>, transform_indices = @transform_1, window_bounds = array<i64: 12, 32>}, {pipeline_mode = #tpu.pipeline_mode<synchronous>, transform_indices = @transform_2, window_bounds = array<i64: 1, 32>}, {pipeline_mode = #tpu.pipeline_mode<synchronous>, transform_indices = @transform_3, window_bounds = array<i64: 3, 32, 32>}, {pipeline_mode = #tpu.pipeline_mode<synchronous>, transform_indices = @transform_4, window_bounds = array<i64: 1, 32>}, {pipeline_mode = #tpu.pipeline_mode<synchronous>, transform_indices = @transform_5, window_bounds = array<i64: 32, 128>}, {pipeline_mode = #tpu.pipeline_mode<synchronous>, transform_indices = @transform_6, window_bounds = array<i64: 1, 128>}, {transform_indices = @transform_7, window_bounds = array<i64: 2, 128>}]} {
    %c0 = arith.constant 0 : index
    %c0_0 = arith.constant 0 : index
    %0 = vector.load %arg1[%c0, %c0_0] : memref<32x12xbf16, #tpu.memory_space<vmem>>, vector<32x12xbf16>
    %c0_1 = arith.constant 0 : index
    %c0_2 = arith.constant 0 : index
    %1 = vector.load %arg2[%c0_1, %c0_2] : memref<12x32xbf16, #tpu.memory_space<vmem>>, vector<12x32xbf16>
    %cst = arith.constant dense<0.000000e+00> : vector<32x32xf32>
    %2 = tpu.matmul %0, %1, %cst {dimension_numbers = #tpu.dot_dimension_numbers<[1], [0], [0], [1], [0, 0, 1, 1], [], []>} : vector<32x12xbf16>, vector<12x32xbf16>, vector<32x32xf32> -> vector<32x32xf32>
    %c0_3 = arith.constant 0 : index
    %c0_4 = arith.constant 0 : index
    %3 = vector.load %arg3[%c0_3, %c0_4] : memref<1x32xf32, #tpu.memory_space<vmem>>, vector<1x32xf32>
    %4 = vector.broadcast %3 : vector<1x32xf32> to vector<32x32xf32>
    %5 = arith.addf %2, %4 : vector<32x32xf32>
    %cst_5 = arith.constant 0.000000e+00 : f32
    %6 = vector.broadcast %cst_5 : f32 to vector<32x32xf32>
    %7 = arith.maximumf %5, %6 : vector<32x32xf32>
    %8 = tpu.iota {dimensions = array<i32: 0>} : vector<32x1xi32>
    %c16_i32 = arith.constant 16 : i32
    %c0_i32 = arith.constant 0 : i32
    %9 = arith.cmpi eq, %c16_i32, %c0_i32 : i32
    %c1_i32 = arith.constant 1 : i32
    %10 = arith.select %9, %c1_i32, %c16_i32 : i32
    %11 = vector.broadcast %10 : i32 to vector<32x1xi32>
    %12 = arith.remsi %8, %11 : vector<32x1xi32>
    %c0_i32_6 = arith.constant 0 : i32
    %13 = vector.broadcast %c0_i32_6 : i32 to vector<32x1xi32>
    %14 = arith.cmpi ne, %12, %13 : vector<32x1xi32>
    %c0_i32_7 = arith.constant 0 : i32
    %15 = vector.broadcast %c0_i32_7 : i32 to vector<32x1xi32>
    %16 = arith.cmpi slt, %12, %15 : vector<32x1xi32>
    %c0_i32_8 = arith.constant 0 : i32
    %17 = arith.cmpi slt, %10, %c0_i32_8 : i32
    %18 = vector.broadcast %17 : i1 to vector<32x1xi1>
    %19 = vector.broadcast %18 : vector<32x1xi1> to vector<32x1xi1>
    %20 = arith.xori %16, %19 : vector<32x1xi1>
    %21 = arith.andi %20, %14 : vector<32x1xi1>
    %22 = vector.broadcast %10 : i32 to vector<32x1xi32>
    %23 = arith.addi %12, %22 : vector<32x1xi32>
    %24 = arith.select %21, %23, %12 : vector<32x1xi1>, vector<32x1xi32>
    %c0_i32_9 = arith.constant 0 : i32
    %25 = vector.broadcast %c0_i32_9 : i32 to vector<32x1xi32>
    %26 = arith.cmpi eq, %24, %25 : vector<32x1xi32>
    %c1_i32_10 = arith.constant 1 : i32
    %27 = tpu.dynamic_rotate %7 by %c1_i32_10 dim 0 : vector<32x32xf32>, i32 -> vector<32x32xf32>
    %cst_11 = arith.constant 0.000000e+00 : f32
    %28 = vector.shape_cast %26 : vector<32x1xi1> to vector<32x1xi1>
    %29 = vector.broadcast %28 : vector<32x1xi1> to vector<32x32xi1>
    %30 = vector.broadcast %cst_11 : f32 to vector<32x32xf32>
    %31 = arith.select %29, %30, %27 : vector<32x32xi1>, vector<32x32xf32>
    %c15_i32 = arith.constant 15 : i32
    %32 = vector.broadcast %c15_i32 : i32 to vector<32x1xi32>
    %33 = arith.cmpi eq, %24, %32 : vector<32x1xi32>
    %c31_i32 = arith.constant 31 : i32
    %34 = tpu.dynamic_rotate %7 by %c31_i32 dim 0 : vector<32x32xf32>, i32 -> vector<32x32xf32>
    %cst_12 = arith.constant 0.000000e+00 : f32
    %35 = vector.shape_cast %33 : vector<32x1xi1> to vector<32x1xi1>
    %36 = vector.broadcast %35 : vector<32x1xi1> to vector<32x32xi1>
    %37 = vector.broadcast %cst_12 : f32 to vector<32x32xf32>
    %38 = arith.select %36, %37, %34 : vector<32x32xi1>, vector<32x32xf32>
    %39 = arith.truncf %31 : vector<32x32xf32> to vector<32x32xbf16>
    %c0_13 = arith.constant 0 : index
    %c0_14 = arith.constant 0 : index
    %c0_15 = arith.constant 0 : index
    %40 = vector.load %arg4[%c0_13, %c0_14, %c0_15] : memref<3x32x32xbf16, #tpu.memory_space<vmem>>, vector<1x32x32xbf16>
    %41 = vector.shape_cast %40 : vector<1x32x32xbf16> to vector<32x32xbf16>
    %cst_16 = arith.constant dense<0.000000e+00> : vector<32x32xf32>
    %42 = tpu.matmul %39, %41, %cst_16 {dimension_numbers = #tpu.dot_dimension_numbers<[1], [0], [0], [1], [0, 0, 1, 1], [], []>} : vector<32x32xbf16>, vector<32x32xbf16>, vector<32x32xf32> -> vector<32x32xf32>
    %43 = arith.truncf %7 : vector<32x32xf32> to vector<32x32xbf16>
    %c1 = arith.constant 1 : index
    %c0_17 = arith.constant 0 : index
    %c0_18 = arith.constant 0 : index
    %44 = vector.load %arg4[%c1, %c0_17, %c0_18] : memref<3x32x32xbf16, #tpu.memory_space<vmem>>, vector<1x32x32xbf16>
    %45 = vector.shape_cast %44 : vector<1x32x32xbf16> to vector<32x32xbf16>
    %cst_19 = arith.constant dense<0.000000e+00> : vector<32x32xf32>
    %46 = tpu.matmul %43, %45, %cst_19 {dimension_numbers = #tpu.dot_dimension_numbers<[1], [0], [0], [1], [0, 0, 1, 1], [], []>} : vector<32x32xbf16>, vector<32x32xbf16>, vector<32x32xf32> -> vector<32x32xf32>
    %47 = arith.addf %42, %46 : vector<32x32xf32>
    %48 = arith.truncf %38 : vector<32x32xf32> to vector<32x32xbf16>
    %c2 = arith.constant 2 : index
    %c0_20 = arith.constant 0 : index
    %c0_21 = arith.constant 0 : index
    %49 = vector.load %arg4[%c2, %c0_20, %c0_21] : memref<3x32x32xbf16, #tpu.memory_space<vmem>>, vector<1x32x32xbf16>
    %50 = vector.shape_cast %49 : vector<1x32x32xbf16> to vector<32x32xbf16>
    %cst_22 = arith.constant dense<0.000000e+00> : vector<32x32xf32>
    %51 = tpu.matmul %48, %50, %cst_22 {dimension_numbers = #tpu.dot_dimension_numbers<[1], [0], [0], [1], [0, 0, 1, 1], [], []>} : vector<32x32xbf16>, vector<32x32xbf16>, vector<32x32xf32> -> vector<32x32xf32>
    %52 = arith.addf %47, %51 : vector<32x32xf32>
    %c0_23 = arith.constant 0 : index
    %c0_24 = arith.constant 0 : index
    %53 = vector.load %arg5[%c0_23, %c0_24] : memref<1x32xf32, #tpu.memory_space<vmem>>, vector<1x32xf32>
    %54 = vector.broadcast %53 : vector<1x32xf32> to vector<32x32xf32>
    %55 = arith.addf %52, %54 : vector<32x32xf32>
    %cst_25 = arith.constant 0.000000e+00 : f32
    %56 = vector.broadcast %cst_25 : f32 to vector<32x32xf32>
    %57 = arith.maximumf %55, %56 : vector<32x32xf32>
    %58 = vector.shape_cast %57 : vector<32x32xf32> to vector<2x16x32xf32>
    %cst_26 = arith.constant dense<0.000000e+00> : vector<2x32xf32>
    %59 = vector.multi_reduction <add>, %58, %cst_26 [1] : vector<2x16x32xf32> to vector<2x32xf32>
    %60 = arith.truncf %59 : vector<2x32xf32> to vector<2x32xbf16>
    %c0_27 = arith.constant 0 : index
    %c0_28 = arith.constant 0 : index
    %61 = vector.load %arg6[%c0_27, %c0_28] : memref<32x128xbf16, #tpu.memory_space<vmem>>, vector<32x128xbf16>
    %cst_29 = arith.constant dense<0.000000e+00> : vector<2x128xf32>
    %62 = tpu.matmul %60, %61, %cst_29 {dimension_numbers = #tpu.dot_dimension_numbers<[1], [0], [0], [1], [0, 0, 1, 1], [], []>} : vector<2x32xbf16>, vector<32x128xbf16>, vector<2x128xf32> -> vector<2x128xf32>
    %c0_30 = arith.constant 0 : index
    %c0_31 = arith.constant 0 : index
    %63 = vector.load %arg7[%c0_30, %c0_31] : memref<1x128xf32, #tpu.memory_space<vmem>>, vector<1x128xf32>
    %64 = vector.broadcast %63 : vector<1x128xf32> to vector<2x128xf32>
    %65 = arith.addf %62, %64 : vector<2x128xf32>
    %c0_32 = arith.constant 0 : index
    %c0_33 = arith.constant 0 : index
    %66 = vector.load %arg8[%c0_32, %c0_33] : memref<2x128xf32, #tpu.memory_space<vmem>>, vector<2x128xf32>
    tpu.vector_store %arg8[%c0_32, %c0_33], %65 {strides = array<i32>} : memref<2x128xf32, #tpu.memory_space<vmem>>, vector<2x128xf32>,
    return
  }
  func.func @transform_0(%arg0: i32) -> (i32, i32) {
    %c0_i32 = arith.constant 0 : i32
    %c0_i32_0 = arith.constant 0 : i32
    return %arg0, %c0_i32 : i32, i32
  }
  func.func @transform_1(%arg0: i32) -> (i32, i32) {
    %c0_i32 = arith.constant 0 : i32
    %c0_i32_0 = arith.constant 0 : i32
    %c0_i32_1 = arith.constant 0 : i32
    return %c0_i32, %c0_i32_0 : i32, i32
  }
  func.func @transform_2(%arg0: i32) -> (i32, i32) {
    %c0_i32 = arith.constant 0 : i32
    %c0_i32_0 = arith.constant 0 : i32
    %c0_i32_1 = arith.constant 0 : i32
    return %c0_i32, %c0_i32_0 : i32, i32
  }
  func.func @transform_3(%arg0: i32) -> (i32, i32, i32) {
    %c0_i32 = arith.constant 0 : i32
    %c0_i32_0 = arith.constant 0 : i32
    %c0_i32_1 = arith.constant 0 : i32
    %c0_i32_2 = arith.constant 0 : i32
    return %c0_i32, %c0_i32_0, %c0_i32_1 : i32, i32, i32
  }
  func.func @transform_4(%arg0: i32) -> (i32, i32) {
    %c0_i32 = arith.constant 0 : i32
    %c0_i32_0 = arith.constant 0 : i32
    %c0_i32_1 = arith.constant 0 : i32
    return %c0_i32, %c0_i32_0 : i32, i32
  }
  func.func @transform_5(%arg0: i32) -> (i32, i32) {
    %c0_i32 = arith.constant 0 : i32
    %c0_i32_0 = arith.constant 0 : i32
    %c0_i32_1 = arith.constant 0 : i32
    return %c0_i32, %c0_i32_0 : i32, i32
  }
  func.func @transform_6(%arg0: i32) -> (i32, i32) {
    %c0_i32 = arith.constant 0 : i32
    %c0_i32_0 = arith.constant 0 : i32
    %c0_i32_1 = arith.constant 0 : i32
    return %c0_i32, %c0_i32_0 : i32, i32
  }
  func.func @transform_7(%arg0: i32) -> (i32, i32) {
    %c0_i32 = arith.constant 0 : i32
    %c0_i32_0 = arith.constant 0 : i32
    return %arg0, %c0_i32 : i32, i32
  }
}

</mosaic_0001>

<llo_original>
// kernel: tpu_custom_call.1
$region0: #{tpu_custom_call.1}
  #allocation0 [shape = 'u32[]', space=smem, size = 0x4, offset = 0x4, fixed_abs, tag = 'smem constant byte address 0x4 - core index']
  #allocation1 [shape = 'u32[144,128]{1,0:T(1,128)}', space=vmem, size = 0x12000, scoped, tag = 'internal scratch']
  %s0 = inlined_call_operand.vmem [shape: bf16[32,12], index: 0, kind: input, shape index: {}]
  %s1 = inlined_call_operand.vmem [shape: bf16[12,32], index: 1, kind: input, shape index: {}]
  %s2 = inlined_call_operand.vmem [shape: f32[1,32], index: 2, kind: input, shape index: {}]
  %s3 = inlined_call_operand.hbm [shape: bf16[3,32,32], index: 3, kind: input, shape index: {}]
  %s4 = inlined_call_operand.vmem [shape: f32[1,32], index: 4, kind: input, shape index: {}]
  %s5 = inlined_call_operand.vmem [shape: bf16[32,128], index: 5, kind: input, shape index: {}]
  %s6 = inlined_call_operand.vmem [shape: f32[1,128], index: 6, kind: input, shape index: {}]
  %s7 = inlined_call_operand.hbm [shape: f32[2,128], index: 7, kind: output, shape index: {}]
  %s8 = sld [smem:[#allocation0]]
  $region42: #{tpu_custom_call.1} parent=0
    _
  %s10 = ssub.s32 1, %s8
  %s11 = scalar_select 0, %s10, %s8
  $region1: #{tpu_custom_call.1} parent=0
    #allocation2 [shape = 'u8[24576]{0}', space=vmem, size = 0x6000, scoped, tag = 'input window, operand 3, single buffered']
    #allocation3 [shape = 's32[1]{0}', space=sflag, size = 0x4, scoped, tag = 'scoped memory for tpu_custom_call.1']
    #allocation4 [shape = 's32[1]{0}', space=sflag, size = 0x4, scoped, tag = 'scoped memory for tpu_custom_call.1']
    #allocation5 [shape = 'u8[1024]{0}', space=vmem, size = 0x400, scoped, tag = 'output window, operand 0, single buffered']
    %12 = vsyncpa [#allocation3], 0
    %13 = vsyncpa [#allocation4], 0
    // Predicated region
    $region2: #{tpu_custom_call.1} parent=1 // pred_check
      _
    $region3: #{tpu_custom_call.1} parent=1 // pred_check_branch
      %15 = sbr.rel (0) target = $region5
    $region4: #{tpu_custom_call.1} parent=1 // pred_region
      _
    $region5: #{tpu_custom_call.1} parent=1 // pred_fallthru
      _
    // Predicated region
    $region6: #{tpu_custom_call.1} parent=1 // pred_check
      _
    $region7: #{tpu_custom_call.1} parent=1 // pred_check_branch
      %17 = sbr.rel (0) target = $region9
    $region8: #{tpu_custom_call.1} parent=1 // pred_region
      _
    $region9: #{tpu_custom_call.1} parent=1 // pred_fallthru
      _
    // Predicated region
    $region10: #{tpu_custom_call.1} parent=1 // pred_check
      _
    $region11: #{tpu_custom_call.1} parent=1 // pred_check_branch
      %19 = sbr.rel (0) target = $region13
    $region12: #{tpu_custom_call.1} parent=1 // pred_region
      _
    $region13: #{tpu_custom_call.1} parent=1 // pred_fallthru
      _
    // Predicated region
    $region14: #{tpu_custom_call.1} parent=1 // pred_check
      _
    $region15: #{tpu_custom_call.1} parent=1 // pred_check_branch
      %21 = sbr.rel (0) target = $region17
    $region16: #{tpu_custom_call.1} parent=1 // pred_region
      %s23 = ssub.s32 768, 768
      %24 = vsyncadd [#allocation3], %s23
      %s25 = sshll.u32 [#allocation2], 4
      %s26 = int_to_ptr.vmem [resolvable:$true] %s25
      %31 = dma.hbm_to_vmem [thread:$0]  %s3, 768, %s26, [#allocation3], 64, 64, 4
    $region17: #{tpu_custom_call.1} parent=1 // pred_fallthru
      _
    // Predicated region
    $region18: #{tpu_custom_call.1} parent=1 // pred_check
      _
    $region19: #{tpu_custom_call.1} parent=1 // pred_check_branch
      %33 = sbr.rel (0) target = $region21
    $region20: #{tpu_custom_call.1} parent=1 // pred_region
      _
    $region21: #{tpu_custom_call.1} parent=1 // pred_fallthru
      _
    // Predicated region
    $region22: #{tpu_custom_call.1} parent=1 // pred_check
      _
    $region23: #{tpu_custom_call.1} parent=1 // pred_check_branch
      %35 = sbr.rel (0) target = $region25
    $region24: #{tpu_custom_call.1} parent=1 // pred_region
      _
    $region25: #{tpu_custom_call.1} parent=1 // pred_fallthru
      _
    // Predicated region
    $region26: #{tpu_custom_call.1} parent=1 // pred_check
      _
    $region27: #{tpu_custom_call.1} parent=1 // pred_check_branch
      %37 = sbr.rel (0) target = $region29
    $region28: #{tpu_custom_call.1} parent=1 // pred_region
      _
    $region29: #{tpu_custom_call.1} parent=1 // pred_fallthru
      _
    // Predicated region
    $region30: #{tpu_custom_call.1} parent=1 // pred_check
      _
    $region31: #{tpu_custom_call.1} parent=1 // pred_check_branch
      %39 = sbr.rel (0) target = $region33
    $region32: #{tpu_custom_call.1} parent=1 // pred_region
      %40 = dma.done [#allocation3], 768
    $region33: #{tpu_custom_call.1} parent=1 // pred_fallthru
      _
    %v42 = vld [vmem:[%s0] sm:$0xf]
    %v43 = vld [vmem:[%s0 + $0x4] sm:$0xf]
    %v44 = vld [vmem:[%s0 + $0x8] sm:$0xf]
    %v45 = vld [vmem:[%s0 + $0xc] sm:$0xf]
    %v46 = vld [vmem:[%s1] sm:$0xf]
    %v47 = vld [vmem:[%s1 + $0x4] sm:$0x3]
    %v48 = vld [vmem:[%s2] sm:$0x1]
    %v50 = vlaneseq
    %v51 = vshrl.u32 %v50, 7
    %v52 = vsub.s32 0, %v51
    %v53 = vrot.slane %v48, %v52
    %v59 = vunpack.c.l.b16 %v42
    %v60 = vunpack.c.l.b16 %v43
    %v61 = vunpack.c.l.b16 %v44
    %v62 = vunpack.c.l.b16 %v45
    %v63 = vpack.c.b16 %v60, %v59
    %v64 = vpack.c.b16 %v62, %v61
    %v67 = vunpack.c.l.b16 %v46
    %v68 = vunpack.c.l.b16 %v47
    %v69 = vpack.c.b16 %v68, %v67
    %vm70 = vcmask 97280
    %v72 = vsel %vm70, %v63, 0
    %v75 = vsel %vm70, %v64, 0
    %vm77 = vcmask 1045504
    %v79 = vsel %vm77, %v69, 0
    %81 = vmatprep.subr.bf16.mxu0 0
    %82 = vmatpush1.bf16.msra.mxu0 %v79
    %83 = vmatprep.subr.bf16.mxu0 0
    %84 = vmatpush1.bf16.msra.mxu0 0
    %85 = vmatprep.subr.bf16.mxu0 0
    %86 = vmatpush1.bf16.msra.mxu0 0
    %87 = vmatprep.subr.bf16.mxu0 0
    %88 = vmatpush1.bf16.msra.mxu0 0
    %89 = vmatprep.subr.bf16.mxu0 0
    %90 = vmatpush1.bf16.msra.mxu0 0
    %91 = vmatprep.subr.bf16.mxu0 0
    %92 = vmatpush1.bf16.msra.mxu0 0
    %93 = vmatprep.subr.bf16.mxu0 0
    %94 = vmatpush1.bf16.msra.mxu0 0
    %95 = vmatprep.subr.bf16.mxu0 0
    %96 = vmatpush1.bf16.msra.mxu0 0
    %97 = vmatprep.subr.bf16.mxu0 0
    %98 = vmatpush1.bf16.msra.mxu0 0
    %99 = vmatprep.subr.bf16.mxu0 0
    %100 = vmatpush1.bf16.msra.mxu0 0
    %101 = vmatprep.subr.bf16.mxu0 0
    %102 = vmatpush1.bf16.msra.mxu0 0
    %103 = vmatprep.subr.bf16.mxu0 0
    %104 = vmatpush1.bf16.msra.mxu0 0
    %105 = vmatprep.subr.bf16.mxu0 0
    %106 = vmatpush1.bf16.msra.mxu0 0
    %107 = vmatprep.subr.bf16.mxu0 0
    %108 = vmatpush1.bf16.msra.mxu0 0
    %109 = vmatprep.subr.bf16.mxu0 0
    %110 = vmatpush1.bf16.msra.mxu0 0
    %111 = vmatprep.subr.bf16.mxu0 0
    %112 = vmatpush1.bf16.msra.mxu0 0
    %113 = vmatprep.mubr.bf16.mxu0 0
    %114 = vmatmul.mubr.bf16.gmra.mrb[0].mxu0 %v72
    %v115 = vpop.f32.mrb[0].mxu0
    %v116 = vadd.f32 %v53, %v115
    %v117 = vpop.f32.mrb[0].mxu0
    %v118 = vpop.f32.mrb[0].mxu0
    %v119 = vadd.f32 %v53, %v118
    %v120 = vpop.f32.mrb[0].mxu0
    %121 = vmatprep.mubr.bf16.mxu0 0
    %122 = vmatmul.mubr.bf16.gmra.mrb[0].mxu0 %v75
    %v123 = vpop.f32.mrb[0].mxu0
    %v124 = vadd.f32 %v53, %v123
    %v125 = vpop.f32.mrb[0].mxu0
    %v126 = vpop.f32.mrb[0].mxu0
    %v127 = vadd.f32 %v53, %v126
    %v128 = vpop.f32.mrb[0].mxu0
    %129 = vdwg.mxu0
    %v130 = vmax.f32 %v116, 0.0
    %v131 = vmax.f32 %v119, 0.0
    %v132 = vmax.f32 %v124, 0.0
    %v133 = vmax.f32 %v127, 0.0
    %v134 = vlaneseq
    %v135 = vshrl.u32 %v134, 7
    %v136 = vadd.s32 %v135, 8
    %v137 = vadd.s32 %v135, 16
    %v138 = vadd.s32 %v135, 24
    %vm139 = vcmp.lt.s32.totalorder %v135, 0
    %v140 = vsub.s32 0, %v135
    %v141 = vsel %vm139, %v140, %v135
    %v142 = vshrl.u32 %v141, 4
    %v143 = vand.u32 %v141, 15
    %v144 = vsub.s32 0, %v143
    %v145 = vsel %vm139, %v144, %v143
    %vm146 = vcmp.lt.s32.totalorder %v136, 0
    %v147 = vsub.s32 0, %v136
    %v148 = vsel %vm146, %v147, %v136
    %v149 = vshrl.u32 %v148, 4
    %v150 = vand.u32 %v148, 15
    %v151 = vsub.s32 0, %v150
    %v152 = vsel %vm146, %v151, %v150
    %vm153 = vcmp.lt.s32.totalorder %v137, 0
    %v154 = vsub.s32 0, %v137
    %v155 = vsel %vm153, %v154, %v137
    %v156 = vshrl.u32 %v155, 4
    %v157 = vand.u32 %v155, 15
    %v158 = vsub.s32 0, %v157
    %v159 = vsel %vm153, %v158, %v157
    %vm160 = vcmp.lt.s32.totalorder %v138, 0
    %v161 = vsub.s32 0, %v138
    %v162 = vsel %vm160, %v161, %v138
    %v163 = vshrl.u32 %v162, 4
    %v164 = vand.u32 %v162, 15
    %v165 = vsub.s32 0, %v164
    %v166 = vsel %vm160, %v165, %v164
    %vm167 = vcmp.ne.s32.totalorder %v145, 0
    %vm168 = vcmp.ne.s32.totalorder %v152, 0
    %vm169 = vcmp.ne.s32.totalorder %v159, 0
    %vm170 = vcmp.ne.s32.totalorder %v166, 0
    %vm171 = vcmp.lt.s32.totalorder %v145, 0
    %vm172 = vcmp.lt.s32.totalorder %v152, 0
    %vm173 = vcmp.lt.s32.totalorder %v159, 0
    %vm174 = vcmp.lt.s32.totalorder %v166, 0
    %vm175 = vmand %vm171, %vm167
    %vm176 = vmand %vm172, %vm168
    %vm177 = vmand %vm173, %vm169
    %vm178 = vmand %vm174, %vm170
    %v179 = vadd.s32 %v145, 16
    %v180 = vadd.s32 %v152, 16
    %v181 = vadd.s32 %v159, 16
    %v182 = vadd.s32 %v166, 16
    %v183 = vsel %vm175, %v179, %v145
    %v184 = vsel %vm176, %v180, %v152
    %v185 = vsel %vm177, %v181, %v159
    %v186 = vsel %vm178, %v182, %v166
    %vm187 = vcmp.eq.s32.totalorder %v183, 0
    %vm188 = vcmp.eq.s32.totalorder %v184, 0
    %vm189 = vcmp.eq.s32.totalorder %v185, 0
    %vm190 = vcmp.eq.s32.totalorder %v186, 0
    %v191 = vrot.slane %v130, 7
    %v192 = vrot.slane %v131, 7
    %v193 = vrot.slane %v132, 7
    %v194 = vrot.slane %v133, 7
    %vm195 = vcmp.lt.s32.totalorder %v135, 1
    %v196 = vsel %vm195, %v193, %v194
    %v197 = vsel %vm195, %v192, %v193
    %v198 = vsel %vm195, %v191, %v192
    %v199 = vsel %vm195, %v194, %v191
    %v200 = vsel %vm187, 1, 0
    %v201 = vsel %vm188, 1, 0
    %v202 = vsel %vm189, 1, 0
    %v203 = vsel %vm190, 1, 0
    %vm204 = vcmp.eq.s32.totalorder %v200, 1
    %vm205 = vcmp.eq.s32.totalorder %v201, 1
    %vm206 = vcmp.eq.s32.totalorder %v202, 1
    %vm207 = vcmp.eq.s32.totalorder %v203, 1
    %v208 = vsel %vm204, 0.0, %v199
    %v209 = vsel %vm205, 0.0, %v198
    %v210 = vsel %vm206, 0.0, %v197
    %v211 = vsel %vm207, 0.0, %v196
    %vm212 = vcmp.eq.s32.totalorder %v183, 15
    %vm213 = vcmp.eq.s32.totalorder %v184, 15
    %vm214 = vcmp.eq.s32.totalorder %v185, 15
    %vm215 = vcmp.eq.s32.totalorder %v186, 15
    %v216 = vrot.slane %v130, 1
    %v217 = vrot.slane %v131, 1
    %v218 = vrot.slane %v132, 1
    %v219 = vrot.slane %v133, 1
    %vm220 = vcmp.lt.s32.totalorder %v135, 7
    %v221 = vsel %vm220, %v218, %v219
    %v222 = vsel %vm220, %v217, %v218
    %v223 = vsel %vm220, %v216, %v217
    %v224 = vsel %vm220, %v219, %v216
    %v225 = vsel %vm212, 1, 0
    %v226 = vsel %vm213, 1, 0
    %v227 = vsel %vm214, 1, 0
    %v228 = vsel %vm215, 1, 0
    %vm229 = vcmp.eq.s32.totalorder %v225, 1
    %vm230 = vcmp.eq.s32.totalorder %v226, 1
    %vm231 = vcmp.eq.s32.totalorder %v227, 1
    %vm232 = vcmp.eq.s32.totalorder %v228, 1
    %v233 = vsel %vm229, 0.0, %v223
    %v234 = vsel %vm230, 0.0, %v222
    %v235 = vsel %vm231, 0.0, %v221
    %v236 = vsel %vm232, 0.0, %v224
    %v237 = vpack.c.bf16 %v209, %v208
    %v238 = vpack.c.bf16 %v211, %v210
    %v239 = vld [vmem:[#allocation2] sm:$0xf]
    %v240 = vld [vmem:[#allocation2 + $0x4] sm:$0xf]
    %v241 = vld [vmem:[#allocation2 + $0x8] sm:$0xf]
    %v242 = vld [vmem:[#allocation2 + $0xc] sm:$0xf]
    %v243 = vpack.c.bf16 %v131, %v130
    %v244 = vpack.c.bf16 %v133, %v132
    %s245 = scalar_lea.vmem [#allocation2], 16
    %v246 = vld [vmem:[%s245] sm:$0xf]
    %v247 = vld [vmem:[%s245 + $0x4] sm:$0xf]
    %v248 = vld [vmem:[%s245 + $0x8] sm:$0xf]
    %v249 = vld [vmem:[%s245 + $0xc] sm:$0xf]
    %v254 = vunpack.c.l.b16 %v246
    %v255 = vunpack.c.l.b16 %v247
    %v256 = vunpack.c.l.b16 %v248
    %v257 = vunpack.c.l.b16 %v249
    %v258 = vpack.c.b16 %v255, %v254
    %v259 = vpack.c.b16 %v257, %v256
    %vm262 = vcmask 261120
    %v264 = vsel %vm262, %v243, 0
    %v267 = vsel %vm262, %v244, 0
    %269 = vmatprep.subr.bf16.mxu0 0
    %270 = vmatpush1.bf16.msra.mxu0 %v258
    %271 = vmatprep.subr.bf16.mxu0 0
    %272 = vmatpush1.bf16.msra.mxu0 %v259
    %273 = vmatprep.subr.bf16.mxu0 0
    %274 = vmatpush1.bf16.msra.mxu0 0
    %275 = vmatprep.subr.bf16.mxu0 0
    %276 = vmatpush1.bf16.msra.mxu0 0
    %277 = vmatprep.subr.bf16.mxu0 0
    %278 = vmatpush1.bf16.msra.mxu0 0
    %279 = vmatprep.subr.bf16.mxu0 0
    %280 = vmatpush1.bf16.msra.mxu0 0
    %281 = vmatprep.subr.bf16.mxu0 0
    %282 = vmatpush1.bf16.msra.mxu0 0
    %283 = vmatprep.subr.bf16.mxu0 0
    %284 = vmatpush1.bf16.msra.mxu0 0
    %285 = vmatprep.subr.bf16.mxu0 0
    %286 = vmatpush1.bf16.msra.mxu0 0
    %287 = vmatprep.subr.bf16.mxu0 0
    %288 = vmatpush1.bf16.msra.mxu0 0
    %289 = vmatprep.subr.bf16.mxu0 0
    %290 = vmatpush1.bf16.msra.mxu0 0
    %291 = vmatprep.subr.bf16.mxu0 0
    %292 = vmatpush1.bf16.msra.mxu0 0
    %293 = vmatprep.subr.bf16.mxu0 0
    %294 = vmatpush1.bf16.msra.mxu0 0
    %295 = vmatprep.subr.bf16.mxu0 0
    %296 = vmatpush1.bf16.msra.mxu0 0
    %297 = vmatprep.subr.bf16.mxu0 0
    %298 = vmatpush1.bf16.msra.mxu0 0
    %299 = vmatprep.subr.bf16.mxu0 0
    %300 = vmatpush1.bf16.msra.mxu0 0
    %301 = vmatprep.mubr.bf16.mxu0 0
    %302 = vmatmul.mubr.bf16.gmra.mrb[0].mxu0 %v264
    %v303 = vpop.f32.mrb[0].mxu0
    %v304 = vadd.f32 0.0, %v303
    %v305 = vpop.f32.mrb[0].mxu0
    %v306 = vpop.f32.mrb[0].mxu0
    %v307 = vadd.f32 0.0, %v306
    %v308 = vpop.f32.mrb[0].mxu0
    %309 = vmatprep.mubr.bf16.mxu0 0
    %310 = vmatmul.mubr.bf16.gmra.mrb[0].mxu0 %v267
    %v311 = vpop.f32.mrb[0].mxu0
    %v312 = vadd.f32 0.0, %v311
    %v313 = vpop.f32.mrb[0].mxu0
    %v314 = vpop.f32.mrb[0].mxu0
    %v315 = vadd.f32 0.0, %v314
    %v316 = vpop.f32.mrb[0].mxu0
    %317 = vdwg.mxu0
    %v322 = vunpack.c.l.b16 %v239
    %v323 = vunpack.c.l.b16 %v240
    %v324 = vunpack.c.l.b16 %v241
    %v325 = vunpack.c.l.b16 %v242
    %v326 = vpack.c.b16 %v323, %v322
    %v327 = vpack.c.b16 %v325, %v324
    %v331 = vsel %vm262, %v237, 0
    %v334 = vsel %vm262, %v238, 0
    %336 = vmatprep.subr.bf16.mxu0 0
    %337 = vmatpush1.bf16.msra.mxu0 %v326
    %338 = vmatprep.subr.bf16.mxu0 0
    %339 = vmatpush1.bf16.msra.mxu0 %v327
    %340 = vmatprep.subr.bf16.mxu0 0
    %341 = vmatpush1.bf16.msra.mxu0 0
    %342 = vmatprep.subr.bf16.mxu0 0
    %343 = vmatpush1.bf16.msra.mxu0 0
    %344 = vmatprep.subr.bf16.mxu0 0
    %345 = vmatpush1.bf16.msra.mxu0 0
    %346 = vmatprep.subr.bf16.mxu0 0
    %347 = vmatpush1.bf16.msra.mxu0 0
    %348 = vmatprep.subr.bf16.mxu0 0
    %349 = vmatpush1.bf16.msra.mxu0 0
    %350 = vmatprep.subr.bf16.mxu0 0
    %351 = vmatpush1.bf16.msra.mxu0 0
    %352 = vmatprep.subr.bf16.mxu0 0
    %353 = vmatpush1.bf16.msra.mxu0 0
    %354 = vmatprep.subr.bf16.mxu0 0
    %355 = vmatpush1.bf16.msra.mxu0 0
    %356 = vmatprep.subr.bf16.mxu0 0
    %357 = vmatpush1.bf16.msra.mxu0 0
    %358 = vmatprep.subr.bf16.mxu0 0
    %359 = vmatpush1.bf16.msra.mxu0 0
    %360 = vmatprep.subr.bf16.mxu0 0
    %361 = vmatpush1.bf16.msra.mxu0 0
    %362 = vmatprep.subr.bf16.mxu0 0
    %363 = vmatpush1.bf16.msra.mxu0 0
    %364 = vmatprep.subr.bf16.mxu0 0
    %365 = vmatpush1.bf16.msra.mxu0 0
    %366 = vmatprep.subr.bf16.mxu0 0
    %367 = vmatpush1.bf16.msra.mxu0 0
    %368 = vmatprep.mubr.bf16.mxu0 0
    %369 = vmatmul.mubr.bf16.gmra.mrb[0].mxu0 %v331
    %v370 = vpop.f32.mrb[0].mxu0
    %v371 = vadd.f32 %v304, %v370
    %v372 = vpop.f32.mrb[0].mxu0
    %v373 = vpop.f32.mrb[0].mxu0
    %v374 = vadd.f32 %v307, %v373
    %v375 = vpop.f32.mrb[0].mxu0
    %376 = vmatprep.mubr.bf16.mxu0 0
    %377 = vmatmul.mubr.bf16.gmra.mrb[0].mxu0 %v334
    %v378 = vpop.f32.mrb[0].mxu0
    %v379 = vadd.f32 %v312, %v378
    %v380 = vpop.f32.mrb[0].mxu0
    %v381 = vpop.f32.mrb[0].mxu0
    %v382 = vadd.f32 %v315, %v381
    %v383 = vpop.f32.mrb[0].mxu0
    %384 = vdwg.mxu0
    %v385 = vpack.c.bf16 %v234, %v233
    %v386 = vpack.c.bf16 %v236, %v235
    %s387 = scalar_lea.vmem [#allocation2], 32
    %v388 = vld [vmem:[%s387] sm:$0xf]
    %v389 = vld [vmem:[%s387 + $0x4] sm:$0xf]
    %v390 = vld [vmem:[%s387 + $0x8] sm:$0xf]
    %v391 = vld [vmem:[%s387 + $0xc] sm:$0xf]
    %v396 = vunpack.c.l.b16 %v388
    %v397 = vunpack.c.l.b16 %v389
    %v398 = vunpack.c.l.b16 %v390
    %v399 = vunpack.c.l.b16 %v391
    %v400 = vpack.c.b16 %v397, %v396
    %v401 = vpack.c.b16 %v399, %v398
    %v405 = vsel %vm262, %v385, 0
    %v408 = vsel %vm262, %v386, 0
    %410 = vmatprep.subr.bf16.mxu0 0
    %411 = vmatpush1.bf16.msra.mxu0 %v400
    %412 = vmatprep.subr.bf16.mxu0 0
    %413 = vmatpush1.bf16.msra.mxu0 %v401
    %414 = vmatprep.subr.bf16.mxu0 0
    %415 = vmatpush1.bf16.msra.mxu0 0
    %416 = vmatprep.subr.bf16.mxu0 0
    %417 = vmatpush1.bf16.msra.mxu0 0
    %418 = vmatprep.subr.bf16.mxu0 0
    %419 = vmatpush1.bf16.msra.mxu0 0
    %420 = vmatprep.subr.bf16.mxu0 0
    %421 = vmatpush1.bf16.msra.mxu0 0
    %422 = vmatprep.subr.bf16.mxu0 0
    %423 = vmatpush1.bf16.msra.mxu0 0
    %424 = vmatprep.subr.bf16.mxu0 0
    %425 = vmatpush1.bf16.msra.mxu0 0
    %426 = vmatprep.subr.bf16.mxu0 0
    %427 = vmatpush1.bf16.msra.mxu0 0
    %428 = vmatprep.subr.bf16.mxu0 0
    %429 = vmatpush1.bf16.msra.mxu0 0
    %430 = vmatprep.subr.bf16.mxu0 0
    %431 = vmatpush1.bf16.msra.mxu0 0
    %432 = vmatprep.subr.bf16.mxu0 0
    %433 = vmatpush1.bf16.msra.mxu0 0
    %434 = vmatprep.subr.bf16.mxu0 0
    %435 = vmatpush1.bf16.msra.mxu0 0
    %436 = vmatprep.subr.bf16.mxu0 0
    %437 = vmatpush1.bf16.msra.mxu0 0
    %438 = vmatprep.subr.bf16.mxu0 0
    %439 = vmatpush1.bf16.msra.mxu0 0
    %440 = vmatprep.subr.bf16.mxu0 0
    %441 = vmatpush1.bf16.msra.mxu0 0
    %442 = vmatprep.mubr.bf16.mxu0 0
    %443 = vmatmul.mubr.bf16.gmra.mrb[0].mxu0 %v405
    %v444 = vpop.f32.mrb[0].mxu0
    %v445 = vadd.f32 0.0, %v444
    %v446 = vpop.f32.mrb[0].mxu0
    %v447 = vpop.f32.mrb[0].mxu0
    %v448 = vadd.f32 0.0, %v447
    %v449 = vpop.f32.mrb[0].mxu0
    %450 = vmatprep.mubr.bf16.mxu0 0
    %451 = vmatmul.mubr.bf16.gmra.mrb[0].mxu0 %v408
    %v452 = vpop.f32.mrb[0].mxu0
    %v453 = vadd.f32 0.0, %v452
    %v454 = vpop.f32.mrb[0].mxu0
    %v455 = vpop.f32.mrb[0].mxu0
    %v456 = vadd.f32 0.0, %v455
    %v457 = vpop.f32.mrb[0].mxu0
    %458 = vdwg.mxu0
    %v459 = vadd.f32 %v371, %v445
    %v460 = vadd.f32 %v374, %v448
    %v461 = vadd.f32 %v379, %v453
    %v462 = vadd.f32 %v382, %v456
    %v463 = vld [vmem:[%s4] sm:$0x1]
    %v465 = vlaneseq
    %v466 = vshrl.u32 %v465, 7
    %v467 = vsub.s32 0, %v466
    %v468 = vrot.slane %v463, %v467
    %v470 = vadd.f32 %v459, %v468
    %v471 = vadd.f32 %v460, %v468
    %v472 = vadd.f32 %v461, %v468
    %v473 = vadd.f32 %v462, %v468
    %v474 = vmax.f32 %v470, 0.0
    %v475 = vmax.f32 %v471, 0.0
    %v476 = vmax.f32 %v472, 0.0
    %v477 = vmax.f32 %v473, 0.0
    %v478 = vsel %vm262, %v474, 0.0
    %v479 = vsel %vm262, %v475, 0.0
    %v480 = vadd.f32 %v478, %v479
    %v481 = vrot.slane %v480, 4
    %v482 = vadd.f32 %v480, %v481
    %v483 = vrot.slane %v482, 2
    %v484 = vadd.f32 %v482, %v483
    %v485 = vrot.slane %v484, 1
    %v486 = vadd.f32 %v484, %v485
    %v487 = vsel %vm262, %v476, 0.0
    %v488 = vsel %vm262, %v477, 0.0
    %v489 = vadd.f32 %v487, %v488
    %v490 = vrot.slane %v489, 4
    %v491 = vadd.f32 %v489, %v490
    %v492 = vrot.slane %v491, 2
    %v493 = vadd.f32 %v491, %v492
    %v494 = vrot.slane %v493, 1
    %v495 = vadd.f32 %v493, %v494
    %v496 = vpack.c.bf16 %v486, %v486
    %v497 = vpack.c.bf16 %v495, %v495
    %v498 = vld [vmem:[%s5] sm:$0xf]
    %v499 = vld [vmem:[%s5 + $0x4] sm:$0xf]
    %v500 = vld [vmem:[%s5 + $0x8] sm:$0xf]
    %v501 = vld [vmem:[%s5 + $0xc] sm:$0xf]
    %v502 = vld [vmem:[%s6] sm:$0x1]
    %v504 = vlaneseq
    %v505 = vshrl.u32 %v504, 7
    %v506 = vsub.s32 0, %v505
    %v507 = vrot.slane %v502, %v506
    %v511 = vunpack.c.l.b16 %v496
    %v512 = vunpack.c.l.b16 %v497
    %vm513 = vcmask 1041409
    %v514 = vsel %vm513, %v512, %v511
    %v515 = vpack.c.b16 %v514, %v514
    %v520 = vunpack.c.l.b16 %v498
    %v521 = vunpack.c.l.b16 %v499
    %v522 = vunpack.c.l.b16 %v500
    %v523 = vunpack.c.l.b16 %v501
    %v524 = vpack.c.b16 %v521, %v520
    %v525 = vpack.c.b16 %v523, %v522
    %v529 = vsel %vm262, %v515, 0
    %531 = vmatprep.subr.bf16.mxu0 0
    %532 = vmatpush1.bf16.msra.mxu0 %v524
    %533 = vmatprep.subr.bf16.mxu0 0
    %534 = vmatpush1.bf16.msra.mxu0 %v525
    %535 = vmatprep.subr.bf16.mxu0 0
    %536 = vmatpush1.bf16.msra.mxu0 0
    %537 = vmatprep.subr.bf16.mxu0 0
    %538 = vmatpush1.bf16.msra.mxu0 0
    %539 = vmatprep.subr.bf16.mxu0 0
    %540 = vmatpush1.bf16.msra.mxu0 0
    %541 = vmatprep.subr.bf16.mxu0 0
    %542 = vmatpush1.bf16.msra.mxu0 0
    %543 = vmatprep.subr.bf16.mxu0 0
    %544 = vmatpush1.bf16.msra.mxu0 0
    %545 = vmatprep.subr.bf16.mxu0 0
    %546 = vmatpush1.bf16.msra.mxu0 0
    %547 = vmatprep.subr.bf16.mxu0 0
    %548 = vmatpush1.bf16.msra.mxu0 0
    %549 = vmatprep.subr.bf16.mxu0 0
    %550 = vmatpush1.bf16.msra.mxu0 0
    %551 = vmatprep.subr.bf16.mxu0 0
    %552 = vmatpush1.bf16.msra.mxu0 0
    %553 = vmatprep.subr.bf16.mxu0 0
    %554 = vmatpush1.bf16.msra.mxu0 0
    %555 = vmatprep.subr.bf16.mxu0 0
    %556 = vmatpush1.bf16.msra.mxu0 0
    %557 = vmatprep.subr.bf16.mxu0 0
    %558 = vmatpush1.bf16.msra.mxu0 0
    %559 = vmatprep.subr.bf16.mxu0 0
    %560 = vmatpush1.bf16.msra.mxu0 0
    %561 = vmatprep.subr.bf16.mxu0 0
    %562 = vmatpush1.bf16.msra.mxu0 0
    %563 = vmatprep.mubr.bf16.mxu0 0
    %564 = vmatmul.mubr.bf16.gmra.mrb[0].mxu0 %v529
    %v565 = vpop.f32.mrb[0].mxu0
    %v566 = vadd.f32 %v507, %v565
    %v567 = vpop.f32.mrb[0].mxu0
    %v568 = vpop.f32.mrb[0].mxu0
    %v569 = vpop.f32.mrb[0].mxu0
    %570 = vdwg.mxu0
    %571 = vst [vmem:[#allocation5] sm:$0x3] %v566
    // Predicated region
    $region34: #{tpu_custom_call.1} parent=1 // pred_check
      _
    $region35: #{tpu_custom_call.1} parent=1 // pred_check_branch
      %573 = sbr.rel (0) target = $region37
    $region36: #{tpu_custom_call.1} parent=1 // pred_region
      %s575 = ssub.s32 32, 32
      %576 = vsyncadd [#allocation4], %s575
      %s578 = sshll.u32 [#allocation5], 4
      %s579 = int_to_ptr.vmem [resolvable:$true] %s578
      %581 = dma.vmem_to_hbm [thread:$0]  %s579, 32, %s7, [#allocation4]
    $region37: #{tpu_custom_call.1} parent=1 // pred_fallthru
      _
    // Predicated region
    $region38: #{tpu_custom_call.1} parent=1 // pred_check
      _
    $region39: #{tpu_custom_call.1} parent=1 // pred_check_branch
      %583 = sbr.rel (0) target = $region41
    $region40: #{tpu_custom_call.1} parent=1 // pred_region
      %584 = dma.done [#allocation4], 32
    $region41: #{tpu_custom_call.1} parent=1 // pred_fallthru
      _
    %585 = vsyncpa [#allocation3], 1
    %586 = vsyncpa [#allocation4], 1

</llo_original>
